<compile_context>
chip_gen: v6e
topology: v6e:2x2x1
jax: 0.10.0
libtpu: 0.0.40
codegen_flags: <defaults>
</compile_context>

<pallas_src>
import jax
import jax.numpy as jnp
from jax.experimental import pallas as pl
from jax.experimental.pallas import tpu as pltpu

IN_FEATURES = 30
HIDDEN = 100
CLASSES = 2

# Tile-aligned (padded) shapes used inside the kernel.
IN_PAD = 32        # layer-1 contraction dim 30 -> 32 (padded in VMEM scratch)
HIDDEN_PAD = 128   # 100 -> 128
OUT_W = 8          # narrow output slab (>= CLASSES); wrapper slices [:, :2]

MAX_TILE_B = 2048      # fits comfortably in 32 MiB scoped VMEM on v5e/v6e/v7x
SPLIT_THRESHOLD = 256  # above this, force >= 2 grid tiles (v7x megacore)


def _round_up(n, m):
    return ((n + m - 1) // m) * m


def _forward_tile(x_ref, w1_ref, b1_ref, w2_ref, b2_ref, w3_ref, b3_ref,
                  xpad_ref):
    """Compute (p0, p1, logits) for one (tile_b, IN_FEATURES) batch tile."""
    # Zero-pad the 30 input features to 32 lanes inside VMEM (bf16 scratch),
    # so the layer-1 contraction dim is tile aligned without a wrapper-side
    # HBM round trip for x.
    xpad_ref[:, :IN_FEATURES] = x_ref[...].astype(jnp.bfloat16)
    xpad_ref[:, IN_FEATURES:] = jnp.zeros(
        (xpad_ref.shape[0], IN_PAD - IN_FEATURES), jnp.bfloat16)
    x = xpad_ref[...]  # bf16 (tile_b, IN_PAD)

    # Layer 1: relu(x @ W1 + b1)   (bf16 MXU inputs, f32 accumulation)
    h1 = jnp.dot(x, w1_ref[...], preferred_element_type=jnp.float32)
    h1 = jnp.maximum(h1 + b1_ref[...], 0.0)

    # Layer 2: relu(h1 @ W2 + b2)
    h2 = jnp.dot(h1.astype(jnp.bfloat16), w2_ref[...],
                 preferred_element_type=jnp.float32)
    h2 = jnp.maximum(h2 + b2_ref[...], 0.0)

    # Layer 3: logits = h2 @ W3 + b3   (W3/b3 are 8-wide; cols >= 2 are zero,
    # so logits[:, 2:] == 0 exactly and the wrapper slice [:, :2] is exact)
    logits = jnp.dot(h2.astype(jnp.bfloat16), w3_ref[...],
                     preferred_element_type=jnp.float32)
    logits = logits + b3_ref[...]  # (tile_b, OUT_W)

    # 2-class softmax via sigmoid on the logit difference: no XLU reduce,
    # single exp (EUP) + approx reciprocal (EUP). p0 + p1 == 1 by construction.
    l0 = logits[:, 0:1]
    l1 = logits[:, 1:2]
    p1 = pl.reciprocal(1.0 + jnp.exp(l0 - l1), approx=True)
    p0 = 1.0 - p1
    return p0, p1, logits


def _store_probs(out_ref, p0, p1):
    # Direct column stores; no 128-wide iota / nested selects.
    out_ref[:, 0:1] = p0
    out_ref[:, 1:2] = p1
    out_ref[:, 2:] = jnp.zeros((p0.shape[0], OUT_W - 2), jnp.float32)


def _bnn_kernel(x_ref, w1_ref, b1_ref, w2_ref, b2_ref, w3_ref, b3_ref,
                out_ref, xpad_ref):
    p0, p1, _ = _forward_tile(x_ref, w1_ref, b1_ref, w2_ref, b2_ref,
                              w3_ref, b3_ref, xpad_ref)
    _store_probs(out_ref, p0, p1)


def _bnn_kernel_with_pre(x_ref, w1_ref, b1_ref, w2_ref, b2_ref, w3_ref, b3_ref,
                         out_ref, pre_ref, xpad_ref):
    p0, p1, logits = _forward_tile(x_ref, w1_ref, b1_ref, w2_ref, b2_ref,
                                   w3_ref, b3_ref, xpad_ref)
    _store_probs(out_ref, p0, p1)
    pre_ref[...] = logits


def bayesian_network_forward(x, params, return_pre=False):
    """Pallas forward pass of BayesianNetwork (sample=False / eval path)."""
    x2d = jnp.reshape(x, (-1, IN_FEATURES)).astype(jnp.float32)
    batch = x2d.shape[0]

    # Batch tile selection: big tiles to amortize per-grid-step overhead,
    # but >= 2 tiles for non-tiny batches so v7x megacore sharding has work.
    if batch <= SPLIT_THRESHOLD:
        tile_b = max(8, _round_up(batch, 8))
    else:
        tile_b = min(MAX_TILE_B, _round_up(pl.cdiv(batch, 2), 8))
    batch_pad = _round_up(batch, tile_b)
    grid = (batch_pad // tile_b,)

    # x is passed un-padded in the feature dim (30 == full array dim in the
    # BlockSpec); only pad rows (zeros) if batch isn't a tile multiple.
    x_in = x2d if batch_pad == batch else jnp.pad(
        x2d, ((0, batch_pad - batch), (0, 0)))

    # --- small, one-time weight/bias padding (wrapper side) -----------------
    w1 = jnp.zeros((IN_PAD, HIDDEN_PAD), jnp.bfloat16)
    w1 = w1.at[:IN_FEATURES, :HIDDEN].set(params["w1_mu"].T.astype(jnp.bfloat16))
    w2 = jnp.zeros((HIDDEN_PAD, HIDDEN_PAD), jnp.bfloat16)
    w2 = w2.at[:HIDDEN, :HIDDEN].set(params["w2_mu"].T.astype(jnp.bfloat16))
    w3 = jnp.zeros((HIDDEN_PAD, OUT_W), jnp.bfloat16)
    w3 = w3.at[:HIDDEN, :CLASSES].set(params["w3_mu"].T.astype(jnp.bfloat16))

    b1 = jnp.zeros((1, HIDDEN_PAD), jnp.float32)
    b1 = b1.at[0, :HIDDEN].set(params["b1_mu"].astype(jnp.float32))
    b2 = jnp.zeros((1, HIDDEN_PAD), jnp.float32)
    b2 = b2.at[0, :HIDDEN].set(params["b2_mu"].astype(jnp.float32))
    b3 = jnp.zeros((1, OUT_W), jnp.float32)
    b3 = b3.at[0, :CLASSES].set(params["b3_mu"].astype(jnp.float32))

    # --- specs ---------------------------------------------------------------
    const_map = lambda i: (0, 0)  # weights/biases DMA'd once, VMEM-resident
    in_specs = [
        pl.BlockSpec((tile_b, IN_FEATURES), lambda i: (i, 0)),
        pl.BlockSpec((IN_PAD, HIDDEN_PAD), const_map),
        pl.BlockSpec((1, HIDDEN_PAD), const_map),
        pl.BlockSpec((HIDDEN_PAD, HIDDEN_PAD), const_map),
        pl.BlockSpec((1, HIDDEN_PAD), const_map),
        pl.BlockSpec((HIDDEN_PAD, OUT_W), const_map),
        pl.BlockSpec((1, OUT_W), const_map),
    ]
    out_block = pl.BlockSpec((tile_b, OUT_W), lambda i: (i, 0))

    n_out = 2 if return_pre else 1
    weight_bytes = ((w1.size + w2.size + w3.size) * 2
                    + (b1.size + b2.size + b3.size) * 4)
    cost = pl.CostEstimate(
        flops=2 * batch_pad * (IN_PAD * HIDDEN_PAD
                               + HIDDEN_PAD * HIDDEN_PAD
                               + HIDDEN_PAD * OUT_W),
        transcendentals=2 * batch_pad,  # one exp + one reciprocal per row
        bytes_accessed=x_in.size * 4 + weight_bytes
                       + n_out * batch_pad * OUT_W * 4,
    )

    compiler_params = pltpu.CompilerParams(
        dimension_semantics=("parallel",),   # shard batch tiles over v7x's 2 TCs
        vmem_limit_bytes=32 * 1024 * 1024,   # explicit, safe on v5e/v6e/v7x
    )

    scratch_shapes = [pltpu.VMEM((tile_b, IN_PAD), jnp.bfloat16)]

    if return_pre:
        kernel = _bnn_kernel_with_pre
        out_shape = (
            jax.ShapeDtypeStruct((batch_pad, OUT_W), jnp.float32),
            jax.ShapeDtypeStruct((batch_pad, OUT_W), jnp.float32),
        )
        out_specs = (out_block, out_block)
    else:
        kernel = _bnn_kernel
        out_shape = jax.ShapeDtypeStruct((batch_pad, OUT_W), jnp.float32)
        out_specs = out_block

    result = pl.pallas_call(
        kernel,
        out_shape=out_shape,
        grid=grid,
        in_specs=in_specs,
        out_specs=out_specs,
        scratch_shapes=scratch_shapes,
        compiler_params=compiler_params,
        cost_estimate=cost,
    )(x_in, w1, b1, w2, b2, w3, b3)

    if return_pre:
        probs, pre = result
        return probs[:batch, :CLASSES], pre[:batch, :CLASSES]
    return result[:batch, :CLASSES]


def init_params(key):
    """Deterministic init matching BayesianLinear.__init__ mu shapes / ranges."""
    ks = jax.random.split(key, 6)

    def u(k, shape, lo, hi):
        return jax.random.uniform(k, shape, jnp.float32, lo, hi)

    return {
        # weight_mu ~ U(-0.2, 0.2), bias_mu ~ U(-0.2, 0.2)  (PyTorch (out,in) layout)
        "w1_mu": u(ks[0], (HIDDEN, IN_FEATURES), -0.2, 0.2),
        "b1_mu": u(ks[1], (HIDDEN,), -0.2, 0.2),
        "w2_mu": u(ks[2], (HIDDEN, HIDDEN), -0.2, 0.2),
        "b2_mu": u(ks[3], (HIDDEN,), -0.2, 0.2),
        "w3_mu": u(ks[4], (CLASSES, HIDDEN), -0.2, 0.2),
        "b3_mu": u(ks[5], (CLASSES,), -0.2, 0.2),
        # TODO(synk): rho parameters / Gaussian sampling (sample=True) and the
        # log_prior / log_variational_posterior reductions are training-only
        # paths, not part of the inference forward; omitted here.
    }


def _reference_forward(x, params):
    x2d = jnp.reshape(x, (-1, IN_FEATURES)).astype(jnp.float32)
    h1 = jax.nn.relu(x2d @ params["w1_mu"].T + params["b1_mu"])
    h2 = jax.nn.relu(h1 @ params["w2_mu"].T + params["b2_mu"])
    pre = h2 @ params["w3_mu"].T + params["b3_mu"]
    return jax.nn.softmax(pre, axis=1), pre


if __name__ == "__main__":
    key = jax.random.PRNGKey(0)
    pkey, xkey, xkey2 = jax.random.split(key, 3)
    params = init_params(pkey)

    # Small batch of MinMax-scaled-style inputs in [0, 1), 30 features each.
    batch = 8
    x = jax.random.uniform(xkey, (batch, IN_FEATURES), jnp.float32, 0.0, 1.0)

    probs, pre = bayesian_network_forward(x, params, return_pre=True)
    probs_only = bayesian_network_forward(x, params, return_pre=False)
    jax.block_until_ready((probs, pre, probs_only))

    ref_probs, ref_pre = _reference_forward(x, params)
    assert probs.shape == (batch, CLASSES) and pre.shape == (batch, CLASSES)
    assert probs_only.shape == (batch, CLASSES)
    # bf16 MXU inputs with f32 accumulation -> relaxed tolerance vs f32 reference.
    assert jnp.allclose(probs, ref_probs, atol=2e-2, rtol=2e-2)
    assert jnp.allclose(probs_only, ref_probs, atol=2e-2, rtol=2e-2)
    assert jnp.allclose(pre, ref_pre, atol=5e-2, rtol=5e-2)
    assert float(jnp.max(jnp.abs(jnp.sum(probs, axis=1) - 1.0))) < 1e-3

    # Also exercise a batch that isn't a multiple of 8 (row-padding path).
    batch2 = 13
    x2 = jax.random.uniform(xkey2, (batch2, IN_FEATURES), jnp.float32, 0.0, 1.0)
    probs2 = bayesian_network_forward(x2, params, return_pre=False)
    jax.block_until_ready(probs2)
    ref_probs2, _ = _reference_forward(x2, params)
    assert probs2.shape == (batch2, CLASSES)
    assert jnp.allclose(probs2, ref_probs2, atol=2e-2, rtol=2e-2)

    print("KERNEL_OK")
</pallas_src>

<mosaic_0001>
module attributes {stable_mosaic.version = 11 : i64} {
  func.func @_bnn_kernel_with_pre(%arg0: i32, %arg1: memref<8x30xf32, #tpu.memory_space<vmem>>, %arg2: memref<32x128xbf16, #tpu.memory_space<vmem>>, %arg3: memref<1x128xf32, #tpu.memory_space<vmem>>, %arg4: memref<128x128xbf16, #tpu.memory_space<vmem>>, %arg5: memref<1x128xf32, #tpu.memory_space<vmem>>, %arg6: memref<128x8xbf16, #tpu.memory_space<vmem>>, %arg7: memref<1x8xf32, #tpu.memory_space<vmem>>, %arg8: memref<8x8xf32, #tpu.memory_space<vmem>>, %arg9: memref<8x8xf32, #tpu.memory_space<vmem>>, %arg10: memref<8x32xbf16, #tpu.memory_space<vmem>>) attributes {dimension_semantics = [#tpu.dimension_semantics<parallel>], iteration_bounds = array<i64: 1>, scalar_prefetch = 0 : i64, scratch_operands = 1 : i64, tpu.core_type = #tpu.core_type<tc>, window_params = [{transform_indices = @transform_0, window_bounds = array<i64: 8, 30>}, {pipeline_mode = #tpu.pipeline_mode<synchronous>, transform_indices = @transform_1, window_bounds = array<i64: 32, 128>}, {pipeline_mode = #tpu.pipeline_mode<synchronous>, transform_indices = @transform_2, window_bounds = array<i64: 1, 128>}, {pipeline_mode = #tpu.pipeline_mode<synchronous>, transform_indices = @transform_3, window_bounds = array<i64: 128, 128>}, {pipeline_mode = #tpu.pipeline_mode<synchronous>, transform_indices = @transform_4, window_bounds = array<i64: 1, 128>}, {pipeline_mode = #tpu.pipeline_mode<synchronous>, transform_indices = @transform_5, window_bounds = array<i64: 128, 8>}, {pipeline_mode = #tpu.pipeline_mode<synchronous>, transform_indices = @transform_6, window_bounds = array<i64: 1, 8>}, {transform_indices = @transform_7, window_bounds = array<i64: 8, 8>}, {transform_indices = @transform_8, window_bounds = array<i64: 8, 8>}]} {
    %c0 = arith.constant 0 : index
    %c0_0 = arith.constant 0 : index
    %0 = vector.load %arg1[%c0, %c0_0] : memref<8x30xf32, #tpu.memory_space<vmem>>, vector<8x30xf32>
    %1 = arith.truncf %0 : vector<8x30xf32> to vector<8x30xbf16>
    %c0_1 = arith.constant 0 : index
    %c0_2 = arith.constant 0 : index
    %2 = vector.load %arg10[%c0_1, %c0_2] : memref<8x32xbf16, #tpu.memory_space<vmem>>, vector<8x30xbf16>
    tpu.vector_store %arg10[%c0_1, %c0_2], %1 {strides = array<i32>} : memref<8x32xbf16, #tpu.memory_space<vmem>>, vector<8x30xbf16>,
    %cst = arith.constant 0.000000e+00 : bf16
    %3 = vector.broadcast %cst : bf16 to vector<8x2xbf16>
    %c0_3 = arith.constant 0 : index
    %c30 = arith.constant 30 : index
    %4 = vector.load %arg10[%c0_3, %c30] : memref<8x32xbf16, #tpu.memory_space<vmem>>, vector<8x2xbf16>
    tpu.vector_store %arg10[%c0_3, %c30], %3 {strides = array<i32>} : memref<8x32xbf16, #tpu.memory_space<vmem>>, vector<8x2xbf16>,
    %c0_4 = arith.constant 0 : index
    %c0_5 = arith.constant 0 : index
    %5 = vector.load %arg10[%c0_4, %c0_5] : memref<8x32xbf16, #tpu.memory_space<vmem>>, vector<8x32xbf16>
    %c0_6 = arith.constant 0 : index
    %c0_7 = arith.constant 0 : index
    %6 = vector.load %arg2[%c0_6, %c0_7] : memref<32x128xbf16, #tpu.memory_space<vmem>>, vector<32x128xbf16>
    %cst_8 = arith.constant dense<0.000000e+00> : vector<8x128xf32>
    %7 = tpu.matmul %5, %6, %cst_8 {dimension_numbers = #tpu.dot_dimension_numbers<[1], [0], [0], [1], [0, 0, 1, 1], [], []>} : vector<8x32xbf16>, vector<32x128xbf16>, vector<8x128xf32> -> vector<8x128xf32>
    %c0_9 = arith.constant 0 : index
    %c0_10 = arith.constant 0 : index
    %8 = vector.load %arg3[%c0_9, %c0_10] : memref<1x128xf32, #tpu.memory_space<vmem>>, vector<1x128xf32>
    %9 = vector.broadcast %8 : vector<1x128xf32> to vector<8x128xf32>
    %10 = arith.addf %7, %9 : vector<8x128xf32>
    %cst_11 = arith.constant 0.000000e+00 : f32
    %11 = vector.broadcast %cst_11 : f32 to vector<8x128xf32>
    %12 = arith.maximumf %10, %11 : vector<8x128xf32>
    %13 = arith.truncf %12 : vector<8x128xf32> to vector<8x128xbf16>
    %c0_12 = arith.constant 0 : index
    %c0_13 = arith.constant 0 : index
    %14 = vector.load %arg4[%c0_12, %c0_13] : memref<128x128xbf16, #tpu.memory_space<vmem>>, vector<128x128xbf16>
    %cst_14 = arith.constant dense<0.000000e+00> : vector<8x128xf32>
    %15 = tpu.matmul %13, %14, %cst_14 {dimension_numbers = #tpu.dot_dimension_numbers<[1], [0], [0], [1], [0, 0, 1, 1], [], []>} : vector<8x128xbf16>, vector<128x128xbf16>, vector<8x128xf32> -> vector<8x128xf32>
    %c0_15 = arith.constant 0 : index
    %c0_16 = arith.constant 0 : index
    %16 = vector.load %arg5[%c0_15, %c0_16] : memref<1x128xf32, #tpu.memory_space<vmem>>, vector<1x128xf32>
    %17 = vector.broadcast %16 : vector<1x128xf32> to vector<8x128xf32>
    %18 = arith.addf %15, %17 : vector<8x128xf32>
    %cst_17 = arith.constant 0.000000e+00 : f32
    %19 = vector.broadcast %cst_17 : f32 to vector<8x128xf32>
    %20 = arith.maximumf %18, %19 : vector<8x128xf32>
    %21 = arith.truncf %20 : vector<8x128xf32> to vector<8x128xbf16>
    %c0_18 = arith.constant 0 : index
    %c0_19 = arith.constant 0 : index
    %22 = vector.load %arg6[%c0_18, %c0_19] : memref<128x8xbf16, #tpu.memory_space<vmem>>, vector<128x8xbf16>
    %cst_20 = arith.constant dense<0.000000e+00> : vector<8x8xf32>
    %23 = tpu.matmul %21, %22, %cst_20 {dimension_numbers = #tpu.dot_dimension_numbers<[1], [0], [0], [1], [0, 0, 1, 1], [], []>} : vector<8x128xbf16>, vector<128x8xbf16>, vector<8x8xf32> -> vector<8x8xf32>
    %c0_21 = arith.constant 0 : index
    %c0_22 = arith.constant 0 : index
    %24 = vector.load %arg7[%c0_21, %c0_22] : memref<1x8xf32, #tpu.memory_space<vmem>>, vector<1x8xf32>
    %25 = vector.broadcast %24 : vector<1x8xf32> to vector<8x8xf32>
    %26 = arith.addf %23, %25 : vector<8x8xf32>
    %27 = vector.extract_strided_slice %26 {offsets = [0, 0], sizes = [8, 1], strides = [1, 1]} : vector<8x8xf32> to vector<8x1xf32>
    %28 = vector.extract_strided_slice %26 {offsets = [0, 1], sizes = [8, 1], strides = [1, 1]} : vector<8x8xf32> to vector<8x1xf32>
    %29 = arith.subf %27, %28 : vector<8x1xf32>
    %30 = math.exp %29 : vector<8x1xf32>
    %cst_23 = arith.constant 1.000000e+00 : f32
    %31 = vector.broadcast %cst_23 : f32 to vector<8x1xf32>
    %32 = arith.addf %31, %30 : vector<8x1xf32>
    %33 = tpu.reciprocal %32 {approx = true} : vector<8x1xf32> -> vector<8x1xf32>
    %cst_24 = arith.constant 1.000000e+00 : f32
    %34 = vector.broadcast %cst_24 : f32 to vector<8x1xf32>
    %35 = arith.subf %34, %33 : vector<8x1xf32>
    %c0_25 = arith.constant 0 : index
    %c0_26 = arith.constant 0 : index
    %36 = vector.load %arg8[%c0_25, %c0_26] : memref<8x8xf32, #tpu.memory_space<vmem>>, vector<8x1xf32>
    tpu.vector_store %arg8[%c0_25, %c0_26], %35 {strides = array<i32>} : memref<8x8xf32, #tpu.memory_space<vmem>>, vector<8x1xf32>,
    %c0_27 = arith.constant 0 : index
    %c1 = arith.constant 1 : index
    %37 = vector.load %arg8[%c0_27, %c1] : memref<8x8xf32, #tpu.memory_space<vmem>>, vector<8x1xf32>
    tpu.vector_store %arg8[%c0_27, %c1], %33 {strides = array<i32>} : memref<8x8xf32, #tpu.memory_space<vmem>>, vector<8x1xf32>,
    %cst_28 = arith.constant 0.000000e+00 : f32
    %38 = vector.broadcast %cst_28 : f32 to vector<8x6xf32>
    %c0_29 = arith.constant 0 : index
    %c2 = arith.constant 2 : index
    %39 = vector.load %arg8[%c0_29, %c2] : memref<8x8xf32, #tpu.memory_space<vmem>>, vector<8x6xf32>
    tpu.vector_store %arg8[%c0_29, %c2], %38 {strides = array<i32>} : memref<8x8xf32, #tpu.memory_space<vmem>>, vector<8x6xf32>,
    %c0_30 = arith.constant 0 : index
    %c0_31 = arith.constant 0 : index
    %40 = vector.load %arg9[%c0_30, %c0_31] : memref<8x8xf32, #tpu.memory_space<vmem>>, vector<8x8xf32>
    tpu.vector_store %arg9[%c0_30, %c0_31], %26 {strides = array<i32>} : memref<8x8xf32, #tpu.memory_space<vmem>>, vector<8x8xf32>,
    return
  }
  func.func @transform_0(%arg0: i32) -> (i32, i32) {
    %c0_i32 = arith.constant 0 : i32
    %c0_i32_0 = arith.constant 0 : i32
    return %arg0, %c0_i32 : i32, i32
  }
  func.func @transform_1(%arg0: i32) -> (i32, i32) {
    %c0_i32 = arith.constant 0 : i32
    %c0_i32_0 = arith.constant 0 : i32
    %c0_i32_1 = arith.constant 0 : i32
    return %c0_i32, %c0_i32_0 : i32, i32
  }
  func.func @transform_2(%arg0: i32) -> (i32, i32) {
    %c0_i32 = arith.constant 0 : i32
    %c0_i32_0 = arith.constant 0 : i32
    %c0_i32_1 = arith.constant 0 : i32
    return %c0_i32, %c0_i32_0 : i32, i32
  }
  func.func @transform_3(%arg0: i32) -> (i32, i32) {
    %c0_i32 = arith.constant 0 : i32
    %c0_i32_0 = arith.constant 0 : i32
    %c0_i32_1 = arith.constant 0 : i32
    return %c0_i32, %c0_i32_0 : i32, i32
  }
  func.func @transform_4(%arg0: i32) -> (i32, i32) {
    %c0_i32 = arith.constant 0 : i32
    %c0_i32_0 = arith.constant 0 : i32
    %c0_i32_1 = arith.constant 0 : i32
    return %c0_i32, %c0_i32_0 : i32, i32
  }
  func.func @transform_5(%arg0: i32) -> (i32, i32) {
    %c0_i32 = arith.constant 0 : i32
    %c0_i32_0 = arith.constant 0 : i32
    %c0_i32_1 = arith.constant 0 : i32
    return %c0_i32, %c0_i32_0 : i32, i32
  }
  func.func @transform_6(%arg0: i32) -> (i32, i32) {
    %c0_i32 = arith.constant 0 : i32
    %c0_i32_0 = arith.constant 0 : i32
    %c0_i32_1 = arith.constant 0 : i32
    return %c0_i32, %c0_i32_0 : i32, i32
  }
  func.func @transform_7(%arg0: i32) -> (i32, i32) {
    %c0_i32 = arith.constant 0 : i32
    %c0_i32_0 = arith.constant 0 : i32
    return %arg0, %c0_i32 : i32, i32
  }
  func.func @transform_8(%arg0: i32) -> (i32, i32) {
    %c0_i32 = arith.constant 0 : i32
    %c0_i32_0 = arith.constant 0 : i32
    return %arg0, %c0_i32 : i32, i32
  }
}

</mosaic_0001>

<llo_original>
// kernel: tpu_custom_call.1
$region0: #{tpu_custom_call.1}
  #allocation0 [shape = 'u32[]', space=smem, size = 0x4, offset = 0x4, fixed_abs, tag = 'smem constant byte address 0x4 - core index']
  #allocation1 [shape = 'u32[144,128]{1,0:T(1,128)}', space=vmem, size = 0x12000, scoped, tag = 'internal scratch']
  #allocation2 [shape = 'bf16[8,32]{1,0:T(8,128)(2,1)}', space=vmem, size = 0x800, scoped, tag = 'scratch operand']
  %s0 = inlined_call_operand.vmem [shape: f32[8,30], index: 0, kind: input, shape index: {}]
  %s1 = inlined_call_operand.hbm [shape: bf16[32,128], index: 1, kind: input, shape index: {}]
  %s2 = inlined_call_operand.vmem [shape: f32[1,128], index: 2, kind: input, shape index: {}]
  %s3 = inlined_call_operand.vmem [shape: bf16[128,128], index: 3, kind: input, shape index: {}]
  %s4 = inlined_call_operand.hbm [shape: f32[1,128], index: 4, kind: input, shape index: {}]
  %s5 = inlined_call_operand.vmem [shape: bf16[128,8], index: 5, kind: input, shape index: {}]
  %s6 = inlined_call_operand.vmem [shape: f32[1,8], index: 6, kind: input, shape index: {}]
  %s7 = inlined_call_operand.hbm [shape: f32[8,8], index: 7, kind: output, shape index: {0}]
  %s8 = inlined_call_operand.hbm [shape: f32[8,8], index: 8, kind: output, shape index: {1}]
  %9 = xla_tuple %s7, %s8
  %s10 = sld [smem:[#allocation0]]
  $region54: #{tpu_custom_call.1} parent=0
    _
  %s12 = ssub.s32 1, %s10
  %s13 = scalar_select 0, %s12, %s10
  $region1: #{tpu_custom_call.1} parent=0
    #allocation3 [shape = 'u8[8192]{0}', space=vmem, size = 0x2000, scoped, tag = 'input window, operand 1, single buffered']
    #allocation4 [shape = 's32[1]{0}', space=sflag, size = 0x4, scoped, tag = 'scoped memory for tpu_custom_call.1']
    #allocation5 [shape = 's32[1]{0}', space=sflag, size = 0x4, scoped, tag = 'scoped memory for tpu_custom_call.1']
    #allocation6 [shape = 'u8[512]{0}', space=vmem, size = 0x400, scoped, tag = 'input window, operand 4, single buffered']
    #allocation7 [shape = 's32[1]{0}', space=sflag, size = 0x4, scoped, tag = 'scoped memory for tpu_custom_call.1']
    #allocation8 [shape = 'u8[4096]{0}', space=vmem, size = 0x1000, scoped, tag = 'output window, operand 0, single buffered']
    #allocation9 [shape = 'u8[4096]{0}', space=vmem, size = 0x1000, scoped, tag = 'output window, operand 1, single buffered']
    #allocation10 [shape = 's32[1]{0}', space=sflag, size = 0x4, scoped, tag = 'scoped memory for tpu_custom_call.1']
    %14 = vsyncpa [#allocation4], 0
    %15 = vsyncpa [#allocation7], 0
    %16 = vsyncpa [#allocation5], 0
    %17 = vsyncpa [#allocation10], 0
    // Predicated region
    $region2: #{tpu_custom_call.1} parent=1 // pred_check
      _
    $region3: #{tpu_custom_call.1} parent=1 // pred_check_branch
      %19 = sbr.rel (0) target = $region5
    $region4: #{tpu_custom_call.1} parent=1 // pred_region
      _
    $region5: #{tpu_custom_call.1} parent=1 // pred_fallthru
      _
    // Predicated region
    $region6: #{tpu_custom_call.1} parent=1 // pred_check
      _
    $region7: #{tpu_custom_call.1} parent=1 // pred_check_branch
      %21 = sbr.rel (0) target = $region9
    $region8: #{tpu_custom_call.1} parent=1 // pred_region
      %s23 = ssub.s32 256, 256
      %24 = vsyncadd [#allocation4], %s23
      %s25 = sshll.u32 [#allocation3], 4
      %s26 = int_to_ptr.vmem [resolvable:$true] %s25
      %31 = dma.hbm_to_vmem [thread:$0]  %s1, 256, %s26, [#allocation4], 64, 64, 4
    $region9: #{tpu_custom_call.1} parent=1 // pred_fallthru
      _
    // Predicated region
    $region10: #{tpu_custom_call.1} parent=1 // pred_check
      _
    $region11: #{tpu_custom_call.1} parent=1 // pred_check_branch
      %33 = sbr.rel (0) target = $region13
    $region12: #{tpu_custom_call.1} parent=1 // pred_region
      _
    $region13: #{tpu_custom_call.1} parent=1 // pred_fallthru
      _
    // Predicated region
    $region14: #{tpu_custom_call.1} parent=1 // pred_check
      _
    $region15: #{tpu_custom_call.1} parent=1 // pred_check_branch
      %35 = sbr.rel (0) target = $region17
    $region16: #{tpu_custom_call.1} parent=1 // pred_region
      _
    $region17: #{tpu_custom_call.1} parent=1 // pred_fallthru
      _
    // Predicated region
    $region18: #{tpu_custom_call.1} parent=1 // pred_check
      _
    $region19: #{tpu_custom_call.1} parent=1 // pred_check_branch
      %37 = sbr.rel (0) target = $region21
    $region20: #{tpu_custom_call.1} parent=1 // pred_region
      %s39 = ssub.s32 16, 16
      %40 = vsyncadd [#allocation7], %s39
      %s42 = sshll.u32 [#allocation6], 4
      %s43 = int_to_ptr.vmem [resolvable:$true] %s42
      %45 = dma.hbm_to_vmem [thread:$0]  %s4, 16, %s43, [#allocation7]
    $region21: #{tpu_custom_call.1} parent=1 // pred_fallthru
      _
    // Predicated region
    $region22: #{tpu_custom_call.1} parent=1 // pred_check
      _
    $region23: #{tpu_custom_call.1} parent=1 // pred_check_branch
      %47 = sbr.rel (0) target = $region25
    $region24: #{tpu_custom_call.1} parent=1 // pred_region
      _
    $region25: #{tpu_custom_call.1} parent=1 // pred_fallthru
      _
    // Predicated region
    $region26: #{tpu_custom_call.1} parent=1 // pred_check
      _
    $region27: #{tpu_custom_call.1} parent=1 // pred_check_branch
      %49 = sbr.rel (0) target = $region29
    $region28: #{tpu_custom_call.1} parent=1 // pred_region
      _
    $region29: #{tpu_custom_call.1} parent=1 // pred_fallthru
      _
    // Predicated region
    $region30: #{tpu_custom_call.1} parent=1 // pred_check
      _
    $region31: #{tpu_custom_call.1} parent=1 // pred_check_branch
      %51 = sbr.rel (0) target = $region33
    $region32: #{tpu_custom_call.1} parent=1 // pred_region
      %52 = dma.done [#allocation4], 256
    $region33: #{tpu_custom_call.1} parent=1 // pred_fallthru
      _
    // Predicated region
    $region34: #{tpu_custom_call.1} parent=1 // pred_check
      _
    $region35: #{tpu_custom_call.1} parent=1 // pred_check_branch
      %54 = sbr.rel (0) target = $region37
    $region36: #{tpu_custom_call.1} parent=1 // pred_region
      %55 = dma.done [#allocation7], 16
    $region37: #{tpu_custom_call.1} parent=1 // pred_fallthru
      _
    %v57 = vld [vmem:[%s0] sm:$0xff]
    %v58 = vpack.c.bf16 %v57, %v57
    %vm59 = vcmask 240640
    %60 = vst.msk [vmem:[#allocation2] sm:$0xf] %vm59, %v58
    %vm61 = vcmask 257264
    %62 = vst.msk [vmem:[#allocation2] sm:$0xf] %vm61, 0
    %v63 = vld [vmem:[#allocation2] sm:$0xf]
    %v64 = vld [vmem:[#allocation3] sm:$0xf]
    %v65 = vld [vmem:[#allocation3 + $0x4] sm:$0xf]
    %v66 = vld [vmem:[#allocation3 + $0x8] sm:$0xf]
    %v67 = vld [vmem:[#allocation3 + $0xc] sm:$0xf]
    %v68 = vld [vmem:[%s2] sm:$0x1]
    %v70 = vlaneseq
    %v71 = vshrl.u32 %v70, 7
    %v72 = vsub.s32 0, %v71
    %v73 = vrot.slane %v68, %v72
    %v79 = vunpack.c.l.b16 %v64
    %v80 = vunpack.c.l.b16 %v65
    %v81 = vunpack.c.l.b16 %v66
    %v82 = vunpack.c.l.b16 %v67
    %v83 = vpack.c.b16 %v80, %v79
    %v84 = vpack.c.b16 %v82, %v81
    %vm87 = vcmask 261120
    %v89 = vsel %vm87, %v63, 0
    %91 = vmatprep.subr.bf16.mxu0 0
    %92 = vmatpush1.bf16.msra.mxu0 0
    %93 = vmatprep.subr.bf16.mxu0 0
    %94 = vmatpush1.bf16.msra.mxu0 0
    %95 = vmatprep.subr.bf16.mxu0 0
    %96 = vmatpush1.bf16.msra.mxu0 0
    %97 = vmatprep.subr.bf16.mxu0 0
    %98 = vmatpush1.bf16.msra.mxu0 0
    %99 = vmatprep.subr.bf16.mxu0 0
    %100 = vmatpush1.bf16.msra.mxu0 0
    %101 = vmatprep.subr.bf16.mxu0 0
    %102 = vmatpush1.bf16.msra.mxu0 0
    %103 = vmatprep.subr.bf16.mxu0 0
    %104 = vmatpush1.bf16.msra.mxu0 %v84
    %105 = vmatprep.subr.bf16.mxu0 0
    %106 = vmatpush1.bf16.msra.mxu0 %v83
    %107 = vmatprep.subr.bf16.mxu0 0
    %108 = vmatpush2.bf16.msra.mxu0 0
    %109 = vmatprep.subr.bf16.mxu0 0
    %110 = vmatpush2.bf16.msra.mxu0 0
    %111 = vmatprep.subr.bf16.mxu0 0
    %112 = vmatpush2.bf16.msra.mxu0 0
    %113 = vmatprep.subr.bf16.mxu0 0
    %114 = vmatpush2.bf16.msra.mxu0 0
    %115 = vmatprep.subr.bf16.mxu0 0
    %116 = vmatpush2.bf16.msra.mxu0 0
    %117 = vmatprep.subr.bf16.mxu0 0
    %118 = vmatpush2.bf16.msra.mxu0 0
    %119 = vmatprep.subr.bf16.mxu0 0
    %120 = vmatpush2.bf16.msra.mxu0 0
    %121 = vmatprep.subr.bf16.mxu0 0
    %122 = vmatpush2.bf16.msra.mxu0 0
    %123 = vmatprep.mubr.bf16.mxu0 0
    %124 = vmatmul.mubr.bf16.gmra.mxu0 %v89
    %v125 = vpop.f32.mrf.mxu0
    %v126 = vadd.f32 %v73, %v125
    %v127 = vpop.f32.mrf.mxu0
    %v128 = vpop.f32.mrf.mxu0
    %v129 = vpop.f32.mrf.mxu0
    %130 = vdwg.mxu0
    %v131 = vmax.f32 %v126, 0.0
    %v132 = vpack.c.bf16 %v131, %v131
    %v133 = vld [vmem:[%s3] sm:$0xf]
    %v134 = vld [vmem:[%s3 + $0x4] sm:$0xf]
    %v135 = vld [vmem:[%s3 + $0x8] sm:$0xf]
    %v136 = vld [vmem:[%s3 + $0xc] sm:$0xf]
    %v137 = vld [vmem:[%s3 + $0x10] sm:$0xf]
    %v138 = vld [vmem:[%s3 + $0x14] sm:$0xf]
    %v139 = vld [vmem:[%s3 + $0x18] sm:$0xf]
    %v140 = vld [vmem:[%s3 + $0x1c] sm:$0xf]
    %v141 = vld [vmem:[%s3 + $0x20] sm:$0xf]
    %v142 = vld [vmem:[%s3 + $0x24] sm:$0xf]
    %v143 = vld [vmem:[%s3 + $0x28] sm:$0xf]
    %v144 = vld [vmem:[%s3 + $0x2c] sm:$0xf]
    %v145 = vld [vmem:[%s3 + $0x30] sm:$0xf]
    %v146 = vld [vmem:[%s3 + $0x34] sm:$0xf]
    %v147 = vld [vmem:[%s3 + $0x38] sm:$0xf]
    %v148 = vld [vmem:[%s3 + $0x3c] sm:$0xf]
    %v149 = vld [vmem:[#allocation6] sm:$0x1]
    %v151 = vlaneseq
    %v152 = vshrl.u32 %v151, 7
    %v153 = vsub.s32 0, %v152
    %v154 = vrot.slane %v149, %v153
    %v172 = vunpack.c.l.b16 %v133
    %v173 = vunpack.c.l.b16 %v134
    %v174 = vunpack.c.l.b16 %v135
    %v175 = vunpack.c.l.b16 %v136
    %v176 = vunpack.c.l.b16 %v137
    %v177 = vunpack.c.l.b16 %v138
    %v178 = vunpack.c.l.b16 %v139
    %v179 = vunpack.c.l.b16 %v140
    %v180 = vunpack.c.l.b16 %v141
    %v181 = vunpack.c.l.b16 %v142
    %v182 = vunpack.c.l.b16 %v143
    %v183 = vunpack.c.l.b16 %v144
    %v184 = vunpack.c.l.b16 %v145
    %v185 = vunpack.c.l.b16 %v146
    %v186 = vunpack.c.l.b16 %v147
    %v187 = vunpack.c.l.b16 %v148
    %v188 = vpack.c.b16 %v173, %v172
    %v189 = vpack.c.b16 %v175, %v174
    %v190 = vpack.c.b16 %v177, %v176
    %v191 = vpack.c.b16 %v179, %v178
    %v192 = vpack.c.b16 %v181, %v180
    %v193 = vpack.c.b16 %v183, %v182
    %v194 = vpack.c.b16 %v185, %v184
    %v195 = vpack.c.b16 %v187, %v186
    %204 = vmatprep.subr.bf16.mxu0 0
    %205 = vmatpush1.bf16.msra.mxu0 %v195
    %206 = vmatprep.subr.bf16.mxu0 0
    %207 = vmatpush1.bf16.msra.mxu0 %v194
    %208 = vmatprep.subr.bf16.mxu0 0
    %209 = vmatpush1.bf16.msra.mxu0 %v193
    %210 = vmatprep.subr.bf16.mxu0 0
    %211 = vmatpush1.bf16.msra.mxu0 %v192
    %212 = vmatprep.subr.bf16.mxu0 0
    %213 = vmatpush1.bf16.msra.mxu0 %v191
    %214 = vmatprep.subr.bf16.mxu0 0
    %215 = vmatpush1.bf16.msra.mxu0 %v190
    %216 = vmatprep.subr.bf16.mxu0 0
    %217 = vmatpush1.bf16.msra.mxu0 %v189
    %218 = vmatprep.subr.bf16.mxu0 0
    %219 = vmatpush1.bf16.msra.mxu0 %v188
    %220 = vmatprep.subr.bf16.mxu0 0
    %221 = vmatpush2.bf16.msra.mxu0 0
    %222 = vmatprep.subr.bf16.mxu0 0
    %223 = vmatpush2.bf16.msra.mxu0 0
    %224 = vmatprep.subr.bf16.mxu0 0
    %225 = vmatpush2.bf16.msra.mxu0 0
    %226 = vmatprep.subr.bf16.mxu0 0
    %227 = vmatpush2.bf16.msra.mxu0 0
    %228 = vmatprep.subr.bf16.mxu0 0
    %229 = vmatpush2.bf16.msra.mxu0 0
    %230 = vmatprep.subr.bf16.mxu0 0
    %231 = vmatpush2.bf16.msra.mxu0 0
    %232 = vmatprep.subr.bf16.mxu0 0
    %233 = vmatpush2.bf16.msra.mxu0 0
    %234 = vmatprep.subr.bf16.mxu0 0
    %235 = vmatpush2.bf16.msra.mxu0 0
    %236 = vmatprep.mubr.bf16.mxu0 0
    %237 = vmatmul.mubr.bf16.gmra.mxu0 %v132
    %v238 = vpop.f32.mrf.mxu0
    %v239 = vadd.f32 %v154, %v238
    %v240 = vpop.f32.mrf.mxu0
    %v241 = vpop.f32.mrf.mxu0
    %v242 = vpop.f32.mrf.mxu0
    %243 = vdwg.mxu0
    %v244 = vmax.f32 %v239, 0.0
    %v245 = vpack.c.bf16 %v244, %v244
    %v246 = vld [vmem:[%s5] sm:$0xf]
    %v247 = vld [vmem:[%s5 + $0x4] sm:$0xf]
    %v248 = vld [vmem:[%s5 + $0x8] sm:$0xf]
    %v249 = vld [vmem:[%s5 + $0xc] sm:$0xf]
    %v250 = vld [vmem:[%s5 + $0x10] sm:$0xf]
    %v251 = vld [vmem:[%s5 + $0x14] sm:$0xf]
    %v252 = vld [vmem:[%s5 + $0x18] sm:$0xf]
    %v253 = vld [vmem:[%s5 + $0x1c] sm:$0xf]
    %v254 = vld [vmem:[%s5 + $0x20] sm:$0xf]
    %v255 = vld [vmem:[%s5 + $0x24] sm:$0xf]
    %v256 = vld [vmem:[%s5 + $0x28] sm:$0xf]
    %v257 = vld [vmem:[%s5 + $0x2c] sm:$0xf]
    %v258 = vld [vmem:[%s5 + $0x30] sm:$0xf]
    %v259 = vld [vmem:[%s5 + $0x34] sm:$0xf]
    %v260 = vld [vmem:[%s5 + $0x38] sm:$0xf]
    %v261 = vld [vmem:[%s5 + $0x3c] sm:$0xf]
    %v262 = vld [vmem:[%s6] sm:$0x1]
    %v264 = vlaneseq
    %v265 = vshrl.u32 %v264, 7
    %v266 = vsub.s32 0, %v265
    %v267 = vrot.slane %v262, %v266
    %v285 = vunpack.c.l.b16 %v246
    %v286 = vunpack.c.l.b16 %v247
    %v287 = vunpack.c.l.b16 %v248
    %v288 = vunpack.c.l.b16 %v249
    %v289 = vunpack.c.l.b16 %v250
    %v290 = vunpack.c.l.b16 %v251
    %v291 = vunpack.c.l.b16 %v252
    %v292 = vunpack.c.l.b16 %v253
    %v293 = vunpack.c.l.b16 %v254
    %v294 = vunpack.c.l.b16 %v255
    %v295 = vunpack.c.l.b16 %v256
    %v296 = vunpack.c.l.b16 %v257
    %v297 = vunpack.c.l.b16 %v258
    %v298 = vunpack.c.l.b16 %v259
    %v299 = vunpack.c.l.b16 %v260
    %v300 = vunpack.c.l.b16 %v261
    %v301 = vpack.c.b16 %v286, %v285
    %v302 = vpack.c.b16 %v288, %v287
    %v303 = vpack.c.b16 %v290, %v289
    %v304 = vpack.c.b16 %v292, %v291
    %v305 = vpack.c.b16 %v294, %v293
    %v306 = vpack.c.b16 %v296, %v295
    %v307 = vpack.c.b16 %v298, %v297
    %v308 = vpack.c.b16 %v300, %v299
    %317 = vmatprep.subr.bf16.mxu0 0
    %318 = vmatpush1.bf16.msra.mxu0 %v308
    %319 = vmatprep.subr.bf16.mxu0 0
    %320 = vmatpush1.bf16.msra.mxu0 %v307
    %321 = vmatprep.subr.bf16.mxu0 0
    %322 = vmatpush1.bf16.msra.mxu0 %v306
    %323 = vmatprep.subr.bf16.mxu0 0
    %324 = vmatpush1.bf16.msra.mxu0 %v305
    %325 = vmatprep.subr.bf16.mxu0 0
    %326 = vmatpush1.bf16.msra.mxu0 %v304
    %327 = vmatprep.subr.bf16.mxu0 0
    %328 = vmatpush1.bf16.msra.mxu0 %v303
    %329 = vmatprep.subr.bf16.mxu0 0
    %330 = vmatpush1.bf16.msra.mxu0 %v302
    %331 = vmatprep.subr.bf16.mxu0 0
    %332 = vmatpush1.bf16.msra.mxu0 %v301
    %333 = vmatprep.subr.bf16.mxu0 0
    %334 = vmatpush2.bf16.msra.mxu0 0
    %335 = vmatprep.subr.bf16.mxu0 0
    %336 = vmatpush2.bf16.msra.mxu0 0
    %337 = vmatprep.subr.bf16.mxu0 0
    %338 = vmatpush2.bf16.msra.mxu0 0
    %339 = vmatprep.subr.bf16.mxu0 0
    %340 = vmatpush2.bf16.msra.mxu0 0
    %341 = vmatprep.subr.bf16.mxu0 0
    %342 = vmatpush2.bf16.msra.mxu0 0
    %343 = vmatprep.subr.bf16.mxu0 0
    %344 = vmatpush2.bf16.msra.mxu0 0
    %345 = vmatprep.subr.bf16.mxu0 0
    %346 = vmatpush2.bf16.msra.mxu0 0
    %347 = vmatprep.subr.bf16.mxu0 0
    %348 = vmatpush2.bf16.msra.mxu0 0
    %349 = vmatprep.mubr.bf16.mxu0 0
    %350 = vmatmul.mubr.bf16.gmra.mxu0 %v245
    %v351 = vpop.f32.mrf.mxu0
    %v352 = vadd.f32 %v267, %v351
    %v353 = vpop.f32.mrf.mxu0
    %v354 = vpop.f32.mrf.mxu0
    %v355 = vpop.f32.mrf.mxu0
    %356 = vdwg.mxu0
    %358 = vrot.lane.b32.xlu0 %v352, 127
    %v359 = vpop.permute.xlu0 %358
    %v361 = vsub.f32 %v352, %v359
    %v362 = vmul.f32 %v361, 1.442695
    %v363 = vpow.pop %v362
    %v364 = vadd.f32 %v363, 1.0
    %v365 = vrcp.pop %v364
    %v366 = vsub.f32 1.0, %v365
    %vm367 = vcmask 7168
    %368 = vst.msk [vmem:[#allocation8] sm:$0xff] %vm367, %v366
    %370 = vrot.lane.b32.xlu0 %v365, 1
    %v371 = vpop.permute.xlu0 %370
    %vm373 = vcmask 15368
    %374 = vst.msk [vmem:[#allocation8] sm:$0xff] %vm373, %v371
    %vm375 = vcmask 64528
    %376 = vst.msk [vmem:[#allocation8] sm:$0xff] %vm375, 0.0
    %vm377 = vcmask 64512
    %378 = vst.msk [vmem:[#allocation9] sm:$0xff] %vm377, %v352
    // Predicated region
    $region38: #{tpu_custom_call.1} parent=1 // pred_check
      _
    $region39: #{tpu_custom_call.1} parent=1 // pred_check_branch
      %380 = sbr.rel (0) target = $region41
    $region40: #{tpu_custom_call.1} parent=1 // pred_region
      %s382 = ssub.s32 128, 128
      %383 = vsyncadd [#allocation5], %s382
      %s385 = sshll.u32 [#allocation8], 4
      %s386 = int_to_ptr.vmem [resolvable:$true] %s385
      %388 = dma.vmem_to_hbm [thread:$0]  %s386, 128, %s7, [#allocation5]
    $region41: #{tpu_custom_call.1} parent=1 // pred_fallthru
      _
    // Predicated region
    $region42: #{tpu_custom_call.1} parent=1 // pred_check
      _
    $region43: #{tpu_custom_call.1} parent=1 // pred_check_branch
      %390 = sbr.rel (0) target = $region45
    $region44: #{tpu_custom_call.1} parent=1 // pred_region
      %s392 = ssub.s32 128, 128
      %393 = vsyncadd [#allocation10], %s392
      %s395 = sshll.u32 [#allocation9], 4
      %s396 = int_to_ptr.vmem [resolvable:$true] %s395
      %398 = dma.vmem_to_hbm [thread:$0]  %s396, 128, %s8, [#allocation10]
    $region45: #{tpu_custom_call.1} parent=1 // pred_fallthru
      _
    // Predicated region
    $region46: #{tpu_custom_call.1} parent=1 // pred_check
      _
    $region47: #{tpu_custom_call.1} parent=1 // pred_check_branch
      %400 = sbr.rel (0) target = $region49
    $region48: #{tpu_custom_call.1} parent=1 // pred_region
      %401 = dma.done [#allocation5], 128
    $region49: #{tpu_custom_call.1} parent=1 // pred_fallthru
      _
    // Predicated region
    $region50: #{tpu_custom_call.1} parent=1 // pred_check
      _
    $region51: #{tpu_custom_call.1} parent=1 // pred_check_branch
      %403 = sbr.rel (0) target = $region53
    $region52: #{tpu_custom_call.1} parent=1 // pred_region
      %404 = dma.done [#allocation10], 128
    $region53: #{tpu_custom_call.1} parent=1 // pred_fallthru
      _
    %405 = vsyncpa [#allocation4], 1
    %406 = vsyncpa [#allocation7], 1
    %407 = vsyncpa [#allocation5], 1
    %408 = vsyncpa [#allocation10], 1

</llo_original>
